<compile_context>
chip_gen: v6e
topology: v6e:2x2x1
jax: 0.10.0
libtpu: 0.0.40
codegen_flags: <defaults>
</compile_context>

<pallas_src>
import functools
import math

import jax
import jax.numpy as jnp
from jax.experimental import pallas as pl
from jax.experimental.pallas import tpu as pltpu


# --------------------------------------------------------------------------
# Kernels (pure elementwise, one VMEM tile per stream)
# --------------------------------------------------------------------------

def _err_kernel(state_ref, recon_ref, td_ref, bu_ref, *, eps_1):
    """td/bu errors when the new state is already known (x given, or clamped)."""
    state = state_ref[...]
    recon = recon_ref[...]
    td_ref[...] = recon / jnp.maximum(eps_1, state)
    bu_ref[...] = state / jnp.maximum(eps_1, recon)


def _update_and_err_kernel(state_ref, td_ref, recon_ref,
                           new_state_ref, new_td_ref, bu_ref, *, eps_1, eps_2):
    """x is None and not clamped: update state from top-down error, then errors."""
    state = jnp.maximum(eps_2, state_ref[...]) * td_ref[...]
    recon = recon_ref[...]
    new_state_ref[...] = state
    new_td_ref[...] = recon / jnp.maximum(eps_1, state)
    bu_ref[...] = state / jnp.maximum(eps_1, recon)


# --------------------------------------------------------------------------
# Launch helper: lane-dense flattening + pipelined 1-D grid
# --------------------------------------------------------------------------

_LANE = 128
_SUBLANE = 8
_MAX_BLOCK_ELEMS = 512 * 1024  # ~2 MiB f32 per stream per buffer (v7x-safe)


def _pick_layout(total):
    """Choose a lane-dense (rows, cols, block_rows) layout, or None for tiny /
    awkward sizes where a single whole-array block is used instead."""
    if total % _LANE != 0:
        return None
    cols = _LANE
    for cand in (2048, 1024, 512, 256, 128):
        if total % cand == 0:
            cols = cand
            break
    rows = total // cols
    limit = max(_SUBLANE, (_MAX_BLOCK_ELEMS // cols) // _SUBLANE * _SUBLANE)
    block_rows = rows if rows <= limit else limit
    return rows, cols, block_rows


def _launch(kernel, arrays, n_out):
    """Run an elementwise kernel over same-shaped arrays, returning n_out arrays."""
    orig_shape = arrays[0].shape
    dtype = arrays[0].dtype
    total = math.prod(orig_shape)
    layout = _pick_layout(total)

    if layout is None:
        # Tiny / non-128-divisible shapes: one whole-array block, no grid.
        outs = pl.pallas_call(
            kernel,
            out_shape=tuple(jax.ShapeDtypeStruct(orig_shape, dtype)
                            for _ in range(n_out)),
        )(*arrays)
        return outs

    rows, cols, block_rows = layout
    flat = [a.reshape(rows, cols) for a in arrays]
    spec = pl.BlockSpec((block_rows, cols), lambda i: (i, 0))
    grid = (pl.cdiv(rows, block_rows),)

    outs = pl.pallas_call(
        kernel,
        out_shape=tuple(jax.ShapeDtypeStruct((rows, cols), dtype)
                        for _ in range(n_out)),
        grid=grid,
        in_specs=[spec] * len(flat),
        out_specs=tuple(spec for _ in range(n_out)),
        compiler_params=pltpu.CompilerParams(
            dimension_semantics=("parallel",)),
    )(*flat)
    return tuple(o.reshape(orig_shape) for o in outs)


# --------------------------------------------------------------------------
# Specialized forward paths (jitted so reshape plumbing fuses away)
# --------------------------------------------------------------------------

@functools.partial(jax.jit, static_argnames=("eps_1",))
def _propagate_errors(state, reconstruction, *, eps_1):
    kernel = functools.partial(_err_kernel, eps_1=eps_1)
    td, bu = _launch(kernel, (state, reconstruction), 2)
    return td, bu


@functools.partial(jax.jit, static_argnames=("eps_1", "eps_2"))
def _update_and_propagate(state, td_err, reconstruction, *, eps_1, eps_2):
    kernel = functools.partial(_update_and_err_kernel, eps_1=eps_1, eps_2=eps_2)
    new_state, td, bu = _launch(kernel, (state, td_err, reconstruction), 3)
    return new_state, td, bu


def input_layer_forward(x, state, reconstruction, td_err,
                        *, eps_1=0.01, eps_2=0.0001, clamped=False):
    """One InputLayer forward step. Returns (bu_err, new_state, new_td_err, pred_err)."""
    eps_1 = float(eps_1)
    eps_2 = float(eps_2)
    if clamped:
        new_state = state                       # passthrough, no extra HBM stream
        new_td, bu = _propagate_errors(state, reconstruction, eps_1=eps_1)
    elif x is not None:
        new_state = x                           # passthrough, no extra HBM stream
        new_td, bu = _propagate_errors(x, reconstruction, eps_1=eps_1)
    else:
        new_state, new_td, bu = _update_and_propagate(
            state, td_err, reconstruction, eps_1=eps_1, eps_2=eps_2)
    pred_err = td_err                           # old td_err passthrough
    return bu, new_state, new_td, pred_err


# --------------------------------------------------------------------------
# Stateful wrapper mirroring the PyTorch module
# --------------------------------------------------------------------------

class InputLayerJAX:
    def __init__(self, n_units, batch_size=1, eps_1=0.01, eps_2=0.0001,
                 dtype=jnp.float32):
        self.n_units = n_units
        self.batch_size = batch_size
        self.eps_1 = eps_1
        self.eps_2 = eps_2
        self.clamped = False
        self.dtype = dtype
        self.reset()

    def reset(self, batch_size=None):
        if batch_size is not None:
            self.batch_size = batch_size
        shape = (self.batch_size, self.n_units)
        self.state = (1.0 / self.n_units) * jnp.ones(shape, self.dtype)
        self.reconstruction = (1.0 / self.n_units) * jnp.ones(shape, self.dtype)
        self.td_err = jnp.zeros(shape, self.dtype)
        self.bu_err = jnp.zeros(shape, self.dtype)

    def forward(self, x=None):
        bu_err, new_state, new_td_err, pred_err = input_layer_forward(
            x, self.state, self.reconstruction, self.td_err,
            eps_1=self.eps_1, eps_2=self.eps_2, clamped=self.clamped)
        self.state = new_state
        self.td_err = new_td_err
        self.pred_err = pred_err
        self.bu_err = bu_err
        return bu_err

    def backward(self, reconstruction):
        self.reconstruction = reconstruction

    def clamp(self, state):
        self.state = state
        self.clamped = True

    def release_clamp(self):
        self.clamped = False


# --------------------------------------------------------------------------
# Demo / correctness checks
# --------------------------------------------------------------------------

if __name__ == "__main__":
    key = jax.random.PRNGKey(0)

    def check(a, b, msg):
        assert jnp.allclose(a, b, rtol=1e-5, atol=1e-6), msg

    # ---- small, non-lane-dense shape (2 x 32): single whole-array block ----
    batch_size, n_units = 2, 32
    layer = InputLayerJAX(n_units=n_units, batch_size=batch_size)

    k1, k2 = jax.random.split(key)
    x = jax.nn.softmax(jax.random.normal(k1, (batch_size, n_units),
                                         dtype=jnp.float32), axis=-1)
    recon = jax.nn.softmax(jax.random.normal(k2, (batch_size, n_units),
                                             dtype=jnp.float32), axis=-1)
    layer.backward(recon)

    # forward with input
    bu_err = jax.block_until_ready(layer.forward(x))
    ref_state = x
    ref_td = recon / jnp.maximum(0.01, ref_state)
    ref_bu = ref_state / jnp.maximum(0.01, recon)
    check(bu_err, ref_bu, "bu_err mismatch (x given)")
    check(layer.td_err, ref_td, "td_err mismatch (x given)")
    check(layer.state, ref_state, "state mismatch (x given)")

    # forward with x=None (state driven by top-down error)
    bu_err2 = jax.block_until_ready(layer.forward(None))
    ref_state2 = jnp.maximum(0.0001, ref_state) * ref_td
    ref_td2 = recon / jnp.maximum(0.01, ref_state2)
    ref_bu2 = ref_state2 / jnp.maximum(0.01, recon)
    check(bu_err2, ref_bu2, "bu_err mismatch (x=None)")
    check(layer.td_err, ref_td2, "td_err mismatch (x=None)")
    check(layer.state, ref_state2, "state mismatch (x=None)")
    check(layer.pred_err, ref_td, "pred_err mismatch (x=None)")

    # clamped forward (state must not change)
    clamp_state = jnp.full((batch_size, n_units), 0.5, jnp.float32)
    layer.clamp(clamp_state)
    bu_err3 = jax.block_until_ready(layer.forward(x))
    ref_td3 = recon / jnp.maximum(0.01, clamp_state)
    ref_bu3 = clamp_state / jnp.maximum(0.01, recon)
    check(bu_err3, ref_bu3, "bu_err mismatch (clamped)")
    check(layer.td_err, ref_td3, "td_err mismatch (clamped)")
    check(layer.state, clamp_state, "state mismatch (clamped)")
    layer.release_clamp()

    # ---- lane-dense path: (16 x 256) = 4096 elems -> flattened (2, 2048) ----
    batch2, units2 = 16, 256
    layer2 = InputLayerJAX(n_units=units2, batch_size=batch2)
    k3, k4 = jax.random.split(k2)
    x2 = jax.nn.softmax(jax.random.normal(k3, (batch2, units2),
                                          dtype=jnp.float32), axis=-1)
    recon2 = jax.nn.softmax(jax.random.normal(k4, (batch2, units2),
                                              dtype=jnp.float32), axis=-1)
    layer2.backward(recon2)
    bu = jax.block_until_ready(layer2.forward(x2))
    check(bu, x2 / jnp.maximum(0.01, recon2), "bu_err mismatch (lane-dense)")
    check(layer2.td_err, recon2 / jnp.maximum(0.01, x2),
          "td_err mismatch (lane-dense)")
    bu_b = jax.block_until_ready(layer2.forward(None))
    st_b = jnp.maximum(0.0001, x2) * (recon2 / jnp.maximum(0.01, x2))
    check(bu_b, st_b / jnp.maximum(0.01, recon2),
          "bu_err mismatch (lane-dense, x=None)")
    check(layer2.state, st_b, "state mismatch (lane-dense, x=None)")

    print("KERNEL_OK")
</pallas_src>

<mosaic_0001>
module attributes {stable_mosaic.version = 11 : i64} {
  func.func @_err_kernel(%arg0: memref<2x32xf32, #tpu.memory_space<vmem>>, %arg1: memref<2x32xf32, #tpu.memory_space<vmem>>, %arg2: memref<2x32xf32, #tpu.memory_space<vmem>>, %arg3: memref<2x32xf32, #tpu.memory_space<vmem>>) attributes {dimension_semantics = [], scalar_prefetch = 0 : i64, scratch_operands = 0 : i64, tpu.core_type = #tpu.core_type<tc>} {
    %c0 = arith.constant 0 : index
    %c0_0 = arith.constant 0 : index
    %0 = vector.load %arg0[%c0, %c0_0] : memref<2x32xf32, #tpu.memory_space<vmem>>, vector<2x32xf32>
    %c0_1 = arith.constant 0 : index
    %c0_2 = arith.constant 0 : index
    %1 = vector.load %arg1[%c0_1, %c0_2] : memref<2x32xf32, #tpu.memory_space<vmem>>, vector<2x32xf32>
    %cst = arith.constant 0.00999999977 : f32
    %2 = vector.broadcast %cst : f32 to vector<2x32xf32>
    %3 = arith.maximumf %2, %0 : vector<2x32xf32>
    %4 = arith.divf %1, %3 : vector<2x32xf32>
    %c0_3 = arith.constant 0 : index
    %c0_4 = arith.constant 0 : index
    %5 = vector.load %arg2[%c0_3, %c0_4] : memref<2x32xf32, #tpu.memory_space<vmem>>, vector<2x32xf32>
    tpu.vector_store %arg2[%c0_3, %c0_4], %4 {strides = array<i32>} : memref<2x32xf32, #tpu.memory_space<vmem>>, vector<2x32xf32>,
    %cst_5 = arith.constant 0.00999999977 : f32
    %6 = vector.broadcast %cst_5 : f32 to vector<2x32xf32>
    %7 = arith.maximumf %6, %1 : vector<2x32xf32>
    %8 = arith.divf %0, %7 : vector<2x32xf32>
    %c0_6 = arith.constant 0 : index
    %c0_7 = arith.constant 0 : index
    %9 = vector.load %arg3[%c0_6, %c0_7] : memref<2x32xf32, #tpu.memory_space<vmem>>, vector<2x32xf32>
    tpu.vector_store %arg3[%c0_6, %c0_7], %8 {strides = array<i32>} : memref<2x32xf32, #tpu.memory_space<vmem>>, vector<2x32xf32>,
    return
  }
}

</mosaic_0001>

<llo_original>
// kernel: _propagate_errors.1
$region0: #{_propagate_errors.1}
  #allocation0 [shape = 'u32[]', space=smem, size = 0x4, offset = 0x4, fixed_abs, tag = 'smem constant byte address 0x4 - core index']
  #allocation1 [shape = 'u32[144,128]{1,0:T(1,128)}', space=vmem, size = 0x12000, scoped, tag = 'internal scratch']
  %s0 = inlined_call_operand.hbm [shape: f32[2,32], index: 0, kind: input, shape index: {}]
  %s1 = inlined_call_operand.hbm [shape: f32[2,32], index: 1, kind: input, shape index: {}]
  %s2 = inlined_call_operand.hbm [shape: f32[2,32], index: 2, kind: output, shape index: {0}]
  %s3 = inlined_call_operand.hbm [shape: f32[2,32], index: 3, kind: output, shape index: {1}]
  %4 = xla_tuple %s2, %s3
  %s5 = sld [smem:[#allocation0]]
  $region34: #{_propagate_errors.1} parent=0
    _
  %s7 = ssub.s32 1, %s5
  %s8 = scalar_select 0, %s7, %s5
  $region1: #{_propagate_errors.1} parent=0
    #allocation2 [shape = 'u8[1024]{0}', space=vmem, size = 0x400, scoped, tag = 'input window, operand 0, single buffered']
    #allocation3 [shape = 's32[1]{0}', space=sflag, size = 0x4, scoped, tag = 'scoped memory for _propagate_errors.1']
    #allocation4 [shape = 's32[1]{0}', space=sflag, size = 0x4, scoped, tag = 'scoped memory for _propagate_errors.1']
    #allocation5 [shape = 'u8[1024]{0}', space=vmem, size = 0x400, scoped, tag = 'input window, operand 1, single buffered']
    #allocation6 [shape = 's32[1]{0}', space=sflag, size = 0x4, scoped, tag = 'scoped memory for _propagate_errors.1']
    #allocation7 [shape = 'u8[1024]{0}', space=vmem, size = 0x400, scoped, tag = 'output window, operand 0, single buffered']
    #allocation8 [shape = 'u8[1024]{0}', space=vmem, size = 0x400, scoped, tag = 'output window, operand 1, single buffered']
    #allocation9 [shape = 's32[1]{0}', space=sflag, size = 0x4, scoped, tag = 'scoped memory for _propagate_errors.1']
    %9 = vsyncpa [#allocation3], 0
    %10 = vsyncpa [#allocation6], 0
    %11 = vsyncpa [#allocation4], 0
    %12 = vsyncpa [#allocation9], 0
    // Predicated region
    $region2: #{_propagate_errors.1} parent=1 // pred_check
      _
    $region3: #{_propagate_errors.1} parent=1 // pred_check_branch
      %14 = sbr.rel (0) target = $region5
    $region4: #{_propagate_errors.1} parent=1 // pred_region
      %s16 = ssub.s32 32, 32
      %17 = vsyncadd [#allocation3], %s16
      %s19 = sshll.u32 [#allocation2], 4
      %s20 = int_to_ptr.vmem [resolvable:$true] %s19
      %22 = dma.hbm_to_vmem [thread:$0]  %s0, 32, %s20, [#allocation3]
    $region5: #{_propagate_errors.1} parent=1 // pred_fallthru
      _
    // Predicated region
    $region6: #{_propagate_errors.1} parent=1 // pred_check
      _
    $region7: #{_propagate_errors.1} parent=1 // pred_check_branch
      %24 = sbr.rel (0) target = $region9
    $region8: #{_propagate_errors.1} parent=1 // pred_region
      %s26 = ssub.s32 32, 32
      %27 = vsyncadd [#allocation6], %s26
      %s29 = sshll.u32 [#allocation5], 4
      %s30 = int_to_ptr.vmem [resolvable:$true] %s29
      %32 = dma.hbm_to_vmem [thread:$0]  %s1, 32, %s30, [#allocation6]
    $region9: #{_propagate_errors.1} parent=1 // pred_fallthru
      _
    // Predicated region
    $region10: #{_propagate_errors.1} parent=1 // pred_check
      _
    $region11: #{_propagate_errors.1} parent=1 // pred_check_branch
      %34 = sbr.rel (0) target = $region13
    $region12: #{_propagate_errors.1} parent=1 // pred_region
      %35 = dma.done [#allocation3], 32
    $region13: #{_propagate_errors.1} parent=1 // pred_fallthru
      _
    // Predicated region
    $region14: #{_propagate_errors.1} parent=1 // pred_check
      _
    $region15: #{_propagate_errors.1} parent=1 // pred_check_branch
      %37 = sbr.rel (0) target = $region17
    $region16: #{_propagate_errors.1} parent=1 // pred_region
      %38 = dma.done [#allocation6], 32
    $region17: #{_propagate_errors.1} parent=1 // pred_fallthru
      _
    %v39 = vld [vmem:[#allocation2] sm:$0x3]
    %v40 = vld [vmem:[#allocation5] sm:$0x3]
    %v41 = vmax.f32 %v39, 0.01
    %v42 = vrcp.pop %v41
    %v43 = vmul.f32 %v40, %v42
    %vm44 = vcmask 254976
    %45 = vst.msk [vmem:[#allocation7] sm:$0x3] %vm44, %v43
    %v46 = vmax.f32 %v40, 0.01
    %v47 = vrcp.pop %v46
    %v48 = vmul.f32 %v39, %v47
    %49 = vst.msk [vmem:[#allocation8] sm:$0x3] %vm44, %v48
    // Predicated region
    $region18: #{_propagate_errors.1} parent=1 // pred_check
      _
    $region19: #{_propagate_errors.1} parent=1 // pred_check_branch
      %51 = sbr.rel (0) target = $region21
    $region20: #{_propagate_errors.1} parent=1 // pred_region
      %s53 = ssub.s32 32, 32
      %54 = vsyncadd [#allocation4], %s53
      %s56 = sshll.u32 [#allocation7], 4
      %s57 = int_to_ptr.vmem [resolvable:$true] %s56
      %59 = dma.vmem_to_hbm [thread:$0]  %s57, 32, %s2, [#allocation4]
    $region21: #{_propagate_errors.1} parent=1 // pred_fallthru
      _
    // Predicated region
    $region22: #{_propagate_errors.1} parent=1 // pred_check
      _
    $region23: #{_propagate_errors.1} parent=1 // pred_check_branch
      %61 = sbr.rel (0) target = $region25
    $region24: #{_propagate_errors.1} parent=1 // pred_region
      %s63 = ssub.s32 32, 32
      %64 = vsyncadd [#allocation9], %s63
      %s66 = sshll.u32 [#allocation8], 4
      %s67 = int_to_ptr.vmem [resolvable:$true] %s66
      %69 = dma.vmem_to_hbm [thread:$0]  %s67, 32, %s3, [#allocation9]
    $region25: #{_propagate_errors.1} parent=1 // pred_fallthru
      _
    // Predicated region
    $region26: #{_propagate_errors.1} parent=1 // pred_check
      _
    $region27: #{_propagate_errors.1} parent=1 // pred_check_branch
      %71 = sbr.rel (0) target = $region29
    $region28: #{_propagate_errors.1} parent=1 // pred_region
      %72 = dma.done [#allocation4], 32
    $region29: #{_propagate_errors.1} parent=1 // pred_fallthru
      _
    // Predicated region
    $region30: #{_propagate_errors.1} parent=1 // pred_check
      _
    $region31: #{_propagate_errors.1} parent=1 // pred_check_branch
      %74 = sbr.rel (0) target = $region33
    $region32: #{_propagate_errors.1} parent=1 // pred_region
      %75 = dma.done [#allocation9], 32
    $region33: #{_propagate_errors.1} parent=1 // pred_fallthru
      _
    %76 = vsyncpa [#allocation3], 1
    %77 = vsyncpa [#allocation6], 1
    %78 = vsyncpa [#allocation4], 1
    %79 = vsyncpa [#allocation9], 1

</llo_original>
